<compile_context>
chip_gen: v5e
topology: v5e:2x2
jax: 0.10.0
libtpu: 0.0.40
codegen_flags: <defaults>
</compile_context>

<pallas_src>
import functools

import jax
import jax.numpy as jnp
from jax import lax
from jax.experimental import pallas as pl
from jax.experimental.pallas import tpu as pltpu

_LANE = 128
_SUBLANE = 8


def _round_up(v, m):
    return (v + m - 1) // m * m


# ---------------------------------------------------------------------------
# Parameter init / packing
# ---------------------------------------------------------------------------
def init_regression_params(key, input_size, hidden_size, output_size, num_layers=1):
    """PyTorch nn.Linear layout: W (out, in), b (out,), uniform(+-1/sqrt(fan_in))."""
    params = []
    for i in range(num_layers):
        in_ch = input_size if i == 0 else hidden_size
        out_ch = hidden_size if i != num_layers - 1 else output_size
        key, kw, kb = jax.random.split(key, 3)
        bound = 1.0 / float(in_ch) ** 0.5
        w = jax.random.uniform(kw, (out_ch, in_ch), jnp.float32, -bound, bound)
        b = jax.random.uniform(kb, (out_ch,), jnp.float32, -bound, bound)
        params.append((w, b))
    return params


def pack_params(params):
    """Transpose + zero-pad params once (outside jit): W.T -> (K_pad, N_pad)
    with both dims rounded up to 128 lanes; b -> (1, N_pad)."""
    packed = []
    for w, b in params:
        out_d, in_d = w.shape
        kp = _round_up(in_d, _LANE)
        np_ = _round_up(out_d, _LANE)
        w_t = jnp.pad(jnp.asarray(w, jnp.float32).T, ((0, kp - in_d), (0, np_ - out_d)))
        b2 = jnp.pad(jnp.asarray(b, jnp.float32), (0, np_ - out_d)).reshape(1, np_)
        packed.append((w_t, b2))
    return packed


# ---------------------------------------------------------------------------
# Fused kernel: the full layer stack in one pallas_call
# ---------------------------------------------------------------------------
def _make_fused_kernel(num_layers):
    def kernel(*refs):
        x_ref = refs[0]
        o_ref = refs[-1]
        x = x_ref[...]                              # (tm, K0_pad) activation stays on-chip
        for i in range(num_layers):
            w = refs[1 + 2 * i][...]                # (K_pad, N_pad)
            b = refs[2 + 2 * i][...]                # (1, N_pad)
            x = jnp.dot(x, w, preferred_element_type=jnp.float32) + b
        o_ref[...] = x.astype(o_ref.dtype)
    return kernel


def _fused_vmem_estimate(batch, packed):
    """Rough VMEM footprint (bytes): double-buffered x/out tiles + weights/biases
    + activation headroom."""
    tm = min(256, _round_up(batch, _SUBLANE))
    in_pad0 = packed[0][0].shape[0]
    n_last = packed[-1][0].shape[1]
    v = 2 * 4 * tm * (in_pad0 + n_last)
    for w_t, b2 in packed:
        kp, np_ = w_t.shape
        v += 2 * 4 * (kp * np_ + np_)
        v += 4 * tm * np_
    return v


def _fused_forward(x, packed, output_size):
    M = x.shape[0]
    in_pad0 = packed[0][0].shape[0]
    n_last = packed[-1][0].shape[1]

    tm = min(256, _round_up(M, _SUBLANE))
    Mp = _round_up(M, tm)
    x_p = jnp.pad(x, ((0, Mp - M), (0, in_pad0 - x.shape[1])))

    in_specs = [pl.BlockSpec((tm, in_pad0), lambda i: (i, 0))]
    flat_args = [x_p]
    for w_t, b2 in packed:
        kp, np_ = w_t.shape
        in_specs.append(pl.BlockSpec((kp, np_), lambda i: (0, 0)))   # resident weights
        in_specs.append(pl.BlockSpec((1, np_), lambda i: (0, 0)))
        flat_args += [w_t, b2]

    est = _fused_vmem_estimate(M, packed)
    vmem_limit = int(min(48 * 2**20, max(16 * 2**20, 2 * est)))

    out = pl.pallas_call(
        _make_fused_kernel(len(packed)),
        out_shape=jax.ShapeDtypeStruct((Mp, n_last), x.dtype),
        grid=(Mp // tm,),
        in_specs=in_specs,
        out_specs=pl.BlockSpec((tm, n_last), lambda i: (i, 0)),
        compiler_params=pltpu.CompilerParams(
            dimension_semantics=("parallel",),   # batch tiles shard across TCs (v7x)
            vmem_limit_bytes=vmem_limit,
        ),
    )(*flat_args)
    return out[:M, :output_size]


# ---------------------------------------------------------------------------
# Tiled per-layer fallback (for shapes whose weights do not fit VMEM)
# ---------------------------------------------------------------------------
def _matmul_bias_kernel(x_ref, w_ref, b_ref, o_ref, acc_ref):
    k = pl.program_id(2)

    @pl.when(k == 0)
    def _():
        acc_ref[...] = jnp.zeros_like(acc_ref)

    acc_ref[...] += jnp.dot(x_ref[...], w_ref[...], preferred_element_type=jnp.float32)

    @pl.when(k == pl.num_programs(2) - 1)
    def _():
        o_ref[...] = (acc_ref[...] + b_ref[...]).astype(o_ref.dtype)


def linear_pallas_tiled(x, w_t, b2, tm_max=256, tn_max=512, tk_max=512):
    """y = x @ w_t + b2 with (tm, tn, tk) tiling and a f32 accumulator.

    x: (M, K) f32;  w_t: (K, N) f32 (transposed weight);  b2: (1, N) f32.
    """
    M, K = x.shape
    K2, N = w_t.shape
    assert K == K2

    tm = min(tm_max, _round_up(M, _SUBLANE))
    tn = min(tn_max, _round_up(N, _LANE))
    tk = min(tk_max, _round_up(K, _LANE))
    Mp, Np, Kp = _round_up(M, tm), _round_up(N, tn), _round_up(K, tk)

    x_p = jnp.pad(x, ((0, Mp - M), (0, Kp - K)))
    w_p = jnp.pad(w_t, ((0, Kp - K), (0, Np - N)))
    b_p = jnp.pad(b2, ((0, 0), (0, Np - N)))

    vmem_need = 4 * (2 * (tm * tk + tk * tn + tm * tn + tn) + tm * tn)
    vmem_limit = int(min(48 * 2**20, max(16 * 2**20, 2 * vmem_need)))

    out = pl.pallas_call(
        _matmul_bias_kernel,
        out_shape=jax.ShapeDtypeStruct((Mp, Np), x.dtype),
        grid=(Mp // tm, Np // tn, Kp // tk),
        in_specs=[
            pl.BlockSpec((tm, tk), lambda i, j, k: (i, k)),
            pl.BlockSpec((tk, tn), lambda i, j, k: (k, j)),
            pl.BlockSpec((1, tn), lambda i, j, k: (0, j)),
        ],
        out_specs=pl.BlockSpec((tm, tn), lambda i, j, k: (i, j)),
        scratch_shapes=[pltpu.VMEM((tm, tn), jnp.float32)],
        compiler_params=pltpu.CompilerParams(
            dimension_semantics=("parallel", "parallel", "arbitrary"),
            vmem_limit_bytes=vmem_limit,
        ),
    )(x_p, w_p, b_p)
    return out[:M, :N]


# ---------------------------------------------------------------------------
# Forward pass
# ---------------------------------------------------------------------------
@functools.partial(jax.jit, static_argnames=("output_size", "force_tiled"))
def regression_forward(x, packed, *, output_size, force_tiled=False):
    """x: (B, input_size) f32; packed = pack_params(params)."""
    use_fused = (not force_tiled) and _fused_vmem_estimate(x.shape[0], packed) <= 40 * 2**20
    if use_fused:
        return _fused_forward(x, packed, output_size)
    # Tiled fallback: pad x features to the first layer's padded K once,
    # run each layer as a tiled matmul (activation widths stay 128-aligned).
    in_pad0 = packed[0][0].shape[0]
    h = jnp.pad(x, ((0, 0), (0, in_pad0 - x.shape[1])))
    for w_t, b2 in packed:
        h = linear_pallas_tiled(h, w_t, b2)
    return h[:, :output_size]


def _reference(x, params):
    y = x
    for w, b in params:
        y = jnp.dot(y, w.T, precision=lax.Precision.HIGHEST) + b
    return y


if __name__ == "__main__":
    key = jax.random.PRNGKey(0)

    # --- small case (matches the module's intent), fused single-kernel path ---
    batch, input_size, hidden_size, output_size, num_layers = 8, 32, 64, 16, 3
    k_params, k_x, k_params2 = jax.random.split(key, 3)
    params = init_regression_params(k_params, input_size, hidden_size, output_size,
                                    num_layers=num_layers)
    packed = pack_params(params)
    x = jax.random.normal(k_x, (batch, input_size), jnp.float32)

    y = regression_forward(x, packed, output_size=output_size)
    jax.block_until_ready(y)
    y_ref = _reference(x, params)
    assert y.shape == (batch, output_size)
    assert jnp.allclose(y, y_ref, atol=1e-4, rtol=1e-4)

    # --- exercise the tiled fallback path (non-128-aligned dims, larger batch) ---
    params2 = init_regression_params(k_params2, 200, 300, 150, num_layers=2)
    packed2 = pack_params(params2)
    x2 = jax.random.normal(jax.random.PRNGKey(1), (100, 200), jnp.float32)
    y2 = regression_forward(x2, packed2, output_size=150, force_tiled=True)
    jax.block_until_ready(y2)
    y2_ref = _reference(x2, params2)
    assert y2.shape == (100, 150)
    assert jnp.allclose(y2, y2_ref, atol=1e-4, rtol=1e-4)

    print("KERNEL_OK")
</pallas_src>

<mosaic_0001>
module attributes {stable_mosaic.version = 11 : i64} {
  func.func @kernel(%arg0: i32, %arg1: memref<8x128xf32, #tpu.memory_space<vmem>>, %arg2: memref<128x128xf32, #tpu.memory_space<vmem>>, %arg3: memref<1x128xf32, #tpu.memory_space<vmem>>, %arg4: memref<128x128xf32, #tpu.memory_space<vmem>>, %arg5: memref<1x128xf32, #tpu.memory_space<vmem>>, %arg6: memref<128x128xf32, #tpu.memory_space<vmem>>, %arg7: memref<1x128xf32, #tpu.memory_space<vmem>>, %arg8: memref<8x128xf32, #tpu.memory_space<vmem>>) attributes {dimension_semantics = [#tpu.dimension_semantics<parallel>], iteration_bounds = array<i64: 1>, scalar_prefetch = 0 : i64, scratch_operands = 0 : i64, tpu.core_type = #tpu.core_type<tc>, window_params = [{transform_indices = @transform_0, window_bounds = array<i64: 8, 128>}, {pipeline_mode = #tpu.pipeline_mode<synchronous>, transform_indices = @transform_1, window_bounds = array<i64: 128, 128>}, {pipeline_mode = #tpu.pipeline_mode<synchronous>, transform_indices = @transform_2, window_bounds = array<i64: 1, 128>}, {pipeline_mode = #tpu.pipeline_mode<synchronous>, transform_indices = @transform_3, window_bounds = array<i64: 128, 128>}, {pipeline_mode = #tpu.pipeline_mode<synchronous>, transform_indices = @transform_4, window_bounds = array<i64: 1, 128>}, {pipeline_mode = #tpu.pipeline_mode<synchronous>, transform_indices = @transform_5, window_bounds = array<i64: 128, 128>}, {pipeline_mode = #tpu.pipeline_mode<synchronous>, transform_indices = @transform_6, window_bounds = array<i64: 1, 128>}, {transform_indices = @transform_7, window_bounds = array<i64: 8, 128>}]} {
    %c0 = arith.constant 0 : index
    %c0_0 = arith.constant 0 : index
    %0 = vector.load %arg1[%c0, %c0_0] : memref<8x128xf32, #tpu.memory_space<vmem>>, vector<8x128xf32>
    %c0_1 = arith.constant 0 : index
    %c0_2 = arith.constant 0 : index
    %1 = vector.load %arg2[%c0_1, %c0_2] : memref<128x128xf32, #tpu.memory_space<vmem>>, vector<128x128xf32>
    %c0_3 = arith.constant 0 : index
    %c0_4 = arith.constant 0 : index
    %2 = vector.load %arg3[%c0_3, %c0_4] : memref<1x128xf32, #tpu.memory_space<vmem>>, vector<1x128xf32>
    %cst = arith.constant dense<0.000000e+00> : vector<8x128xf32>
    %3 = tpu.matmul %0, %1, %cst {dimension_numbers = #tpu.dot_dimension_numbers<[1], [0], [0], [1], [0, 0, 1, 1], [], []>} : vector<8x128xf32>, vector<128x128xf32>, vector<8x128xf32> -> vector<8x128xf32>
    %4 = vector.broadcast %2 : vector<1x128xf32> to vector<8x128xf32>
    %5 = arith.addf %3, %4 : vector<8x128xf32>
    %c0_5 = arith.constant 0 : index
    %c0_6 = arith.constant 0 : index
    %6 = vector.load %arg4[%c0_5, %c0_6] : memref<128x128xf32, #tpu.memory_space<vmem>>, vector<128x128xf32>
    %c0_7 = arith.constant 0 : index
    %c0_8 = arith.constant 0 : index
    %7 = vector.load %arg5[%c0_7, %c0_8] : memref<1x128xf32, #tpu.memory_space<vmem>>, vector<1x128xf32>
    %cst_9 = arith.constant dense<0.000000e+00> : vector<8x128xf32>
    %8 = tpu.matmul %5, %6, %cst_9 {dimension_numbers = #tpu.dot_dimension_numbers<[1], [0], [0], [1], [0, 0, 1, 1], [], []>} : vector<8x128xf32>, vector<128x128xf32>, vector<8x128xf32> -> vector<8x128xf32>
    %9 = vector.broadcast %7 : vector<1x128xf32> to vector<8x128xf32>
    %10 = arith.addf %8, %9 : vector<8x128xf32>
    %c0_10 = arith.constant 0 : index
    %c0_11 = arith.constant 0 : index
    %11 = vector.load %arg6[%c0_10, %c0_11] : memref<128x128xf32, #tpu.memory_space<vmem>>, vector<128x128xf32>
    %c0_12 = arith.constant 0 : index
    %c0_13 = arith.constant 0 : index
    %12 = vector.load %arg7[%c0_12, %c0_13] : memref<1x128xf32, #tpu.memory_space<vmem>>, vector<1x128xf32>
    %cst_14 = arith.constant dense<0.000000e+00> : vector<8x128xf32>
    %13 = tpu.matmul %10, %11, %cst_14 {dimension_numbers = #tpu.dot_dimension_numbers<[1], [0], [0], [1], [0, 0, 1, 1], [], []>} : vector<8x128xf32>, vector<128x128xf32>, vector<8x128xf32> -> vector<8x128xf32>
    %14 = vector.broadcast %12 : vector<1x128xf32> to vector<8x128xf32>
    %15 = arith.addf %13, %14 : vector<8x128xf32>
    %c0_15 = arith.constant 0 : index
    %c0_16 = arith.constant 0 : index
    %16 = vector.load %arg8[%c0_15, %c0_16] : memref<8x128xf32, #tpu.memory_space<vmem>>, vector<8x128xf32>
    tpu.vector_store %arg8[%c0_15, %c0_16], %15 {strides = array<i32>} : memref<8x128xf32, #tpu.memory_space<vmem>>, vector<8x128xf32>,
    return
  }
  func.func @transform_0(%arg0: i32) -> (i32, i32) {
    %c0_i32 = arith.constant 0 : i32
    %c0_i32_0 = arith.constant 0 : i32
    return %arg0, %c0_i32 : i32, i32
  }
  func.func @transform_1(%arg0: i32) -> (i32, i32) {
    %c0_i32 = arith.constant 0 : i32
    %c0_i32_0 = arith.constant 0 : i32
    %c0_i32_1 = arith.constant 0 : i32
    return %c0_i32, %c0_i32_0 : i32, i32
  }
  func.func @transform_2(%arg0: i32) -> (i32, i32) {
    %c0_i32 = arith.constant 0 : i32
    %c0_i32_0 = arith.constant 0 : i32
    %c0_i32_1 = arith.constant 0 : i32
    return %c0_i32, %c0_i32_0 : i32, i32
  }
  func.func @transform_3(%arg0: i32) -> (i32, i32) {
    %c0_i32 = arith.constant 0 : i32
    %c0_i32_0 = arith.constant 0 : i32
    %c0_i32_1 = arith.constant 0 : i32
    return %c0_i32, %c0_i32_0 : i32, i32
  }
  func.func @transform_4(%arg0: i32) -> (i32, i32) {
    %c0_i32 = arith.constant 0 : i32
    %c0_i32_0 = arith.constant 0 : i32
    %c0_i32_1 = arith.constant 0 : i32
    return %c0_i32, %c0_i32_0 : i32, i32
  }
  func.func @transform_5(%arg0: i32) -> (i32, i32) {
    %c0_i32 = arith.constant 0 : i32
    %c0_i32_0 = arith.constant 0 : i32
    %c0_i32_1 = arith.constant 0 : i32
    return %c0_i32, %c0_i32_0 : i32, i32
  }
  func.func @transform_6(%arg0: i32) -> (i32, i32) {
    %c0_i32 = arith.constant 0 : i32
    %c0_i32_0 = arith.constant 0 : i32
    %c0_i32_1 = arith.constant 0 : i32
    return %c0_i32, %c0_i32_0 : i32, i32
  }
  func.func @transform_7(%arg0: i32) -> (i32, i32) {
    %c0_i32 = arith.constant 0 : i32
    %c0_i32_0 = arith.constant 0 : i32
    return %arg0, %c0_i32 : i32, i32
  }
}

</mosaic_0001>

<llo_original>
// kernel: regression_forward.1
$region0: #{regression_forward.1}
  #allocation0 [shape = 'u32[]', space=smem, size = 0x4, offset = 0x4, fixed_abs, tag = 'smem constant byte address 0x4 - core index']
  #allocation1 [shape = 'u32[72,128]{1,0:T(1,128)}', space=vmem, size = 0x9000, scoped, tag = 'internal scratch']
  %s0 = inlined_call_operand.vmem [shape: f32[8,128], index: 0, kind: input, shape index: {}]
  %s1 = inlined_call_operand.hbm [shape: f32[128,128], index: 1, kind: input, shape index: {}]
  %s2 = inlined_call_operand.vmem [shape: f32[1,128], index: 2, kind: input, shape index: {}]
  %s3 = inlined_call_operand.hbm [shape: f32[128,128], index: 3, kind: input, shape index: {}]
  %s4 = inlined_call_operand.vmem [shape: f32[1,128], index: 4, kind: input, shape index: {}]
  %s5 = inlined_call_operand.hbm [shape: f32[128,128], index: 5, kind: input, shape index: {}]
  %s6 = inlined_call_operand.vmem [shape: f32[1,128], index: 6, kind: input, shape index: {}]
  %s7 = inlined_call_operand.hbm [shape: f32[8,128], index: 7, kind: output, shape index: {}]
  %s8 = sld [smem:[#allocation0]]
  $region50: #{regression_forward.1} parent=0
    _
  %s10 = ssub.s32 1, %s8
  %s11 = scalar_select 0, %s10, %s8
  $region1: #{regression_forward.1} parent=0
    #allocation2 [shape = 'u8[65536]{0}', space=vmem, size = 0x10000, scoped, tag = 'input window, operand 1, single buffered']
    #allocation3 [shape = 's32[1]{0}', space=sflag, size = 0x4, scoped, tag = 'scoped memory for regression_forward.1']
    #allocation4 [shape = 's32[1]{0}', space=sflag, size = 0x4, scoped, tag = 'scoped memory for regression_forward.1']
    #allocation5 [shape = 'u8[65536]{0}', space=vmem, size = 0x10000, scoped, tag = 'input window, operand 3, single buffered']
    #allocation6 [shape = 's32[1]{0}', space=sflag, size = 0x4, scoped, tag = 'scoped memory for regression_forward.1']
    #allocation7 [shape = 'u8[65536]{0}', space=vmem, size = 0x10000, scoped, tag = 'input window, operand 5, single buffered']
    #allocation8 [shape = 'u8[4096]{0}', space=vmem, size = 0x1000, scoped, tag = 'output window, operand 0, single buffered']
    %12 = vsyncpa [#allocation3], 0
    %13 = vsyncpa [#allocation6], 0
    %14 = vsyncpa [#allocation4], 0
    // Predicated region
    $region2: #{regression_forward.1} parent=1 // pred_check
      _
    $region3: #{regression_forward.1} parent=1 // pred_check_branch
      %16 = sbr.rel (0) target = $region5
    $region4: #{regression_forward.1} parent=1 // pred_region
      _
    $region5: #{regression_forward.1} parent=1 // pred_fallthru
      _
    // Predicated region
    $region6: #{regression_forward.1} parent=1 // pred_check
      _
    $region7: #{regression_forward.1} parent=1 // pred_check_branch
      %18 = sbr.rel (0) target = $region9
    $region8: #{regression_forward.1} parent=1 // pred_region
      %20 = vsyncadd [#allocation3], 0
      %s21 = sshll.u32 %s1, 4
      %s22 = int_to_ptr.hbm [resolvable:$true] %s21
      %s23 = sshll.u32 [#allocation2], 4
      %s24 = int_to_ptr.vmem [resolvable:$true] %s23
      %29 = dma.hbm_to_vmem [thread:$0]  %s22, 2048, %s24, [#allocation3], 128, 128, 8
    $region9: #{regression_forward.1} parent=1 // pred_fallthru
      _
    // Predicated region
    $region10: #{regression_forward.1} parent=1 // pred_check
      _
    $region11: #{regression_forward.1} parent=1 // pred_check_branch
      %31 = sbr.rel (0) target = $region13
    $region12: #{regression_forward.1} parent=1 // pred_region
      _
    $region13: #{regression_forward.1} parent=1 // pred_fallthru
      _
    // Predicated region
    $region14: #{regression_forward.1} parent=1 // pred_check
      _
    $region15: #{regression_forward.1} parent=1 // pred_check_branch
      %33 = sbr.rel (0) target = $region17
    $region16: #{regression_forward.1} parent=1 // pred_region
      %35 = vsyncadd [#allocation6], 0
      %s36 = sshll.u32 %s3, 4
      %s37 = int_to_ptr.hbm [resolvable:$true] %s36
      %s38 = sshll.u32 [#allocation5], 4
      %s39 = int_to_ptr.vmem [resolvable:$true] %s38
      %44 = dma.hbm_to_vmem [thread:$0]  %s37, 2048, %s39, [#allocation6], 128, 128, 8
    $region17: #{regression_forward.1} parent=1 // pred_fallthru
      _
    // Predicated region
    $region18: #{regression_forward.1} parent=1 // pred_check
      _
    $region19: #{regression_forward.1} parent=1 // pred_check_branch
      %46 = sbr.rel (0) target = $region21
    $region20: #{regression_forward.1} parent=1 // pred_region
      _
    $region21: #{regression_forward.1} parent=1 // pred_fallthru
      _
    // Predicated region
    $region22: #{regression_forward.1} parent=1 // pred_check
      _
    $region23: #{regression_forward.1} parent=1 // pred_check_branch
      %48 = sbr.rel (0) target = $region25
    $region24: #{regression_forward.1} parent=1 // pred_region
      %50 = vsyncadd [#allocation6], 0
      %s51 = sshll.u32 %s5, 4
      %s52 = int_to_ptr.hbm [resolvable:$true] %s51
      %s53 = sshll.u32 [#allocation7], 4
      %s54 = int_to_ptr.vmem [resolvable:$true] %s53
      %59 = dma.hbm_to_vmem [thread:$0]  %s52, 2048, %s54, [#allocation6], 128, 128, 8
    $region25: #{regression_forward.1} parent=1 // pred_fallthru
      _
    // Predicated region
    $region26: #{regression_forward.1} parent=1 // pred_check
      _
    $region27: #{regression_forward.1} parent=1 // pred_check_branch
      %61 = sbr.rel (0) target = $region29
    $region28: #{regression_forward.1} parent=1 // pred_region
      _
    $region29: #{regression_forward.1} parent=1 // pred_fallthru
      _
    // Predicated region
    $region30: #{regression_forward.1} parent=1 // pred_check
      _
    $region31: #{regression_forward.1} parent=1 // pred_check_branch
      %63 = sbr.rel (0) target = $region33
    $region32: #{regression_forward.1} parent=1 // pred_region
      %65 = dma.done [#allocation3], 2048
    $region33: #{regression_forward.1} parent=1 // pred_fallthru
      _
    // Predicated region
    $region34: #{regression_forward.1} parent=1 // pred_check
      _
    $region35: #{regression_forward.1} parent=1 // pred_check_branch
      %67 = sbr.rel (0) target = $region37
    $region36: #{regression_forward.1} parent=1 // pred_region
      %69 = dma.done [#allocation6], 2048
    $region37: #{regression_forward.1} parent=1 // pred_fallthru
      _
    // Predicated region
    $region38: #{regression_forward.1} parent=1 // pred_check
      _
    $region39: #{regression_forward.1} parent=1 // pred_check_branch
      %71 = sbr.rel (0) target = $region41
    $region40: #{regression_forward.1} parent=1 // pred_region
      %73 = dma.done [#allocation6], 2048
    $region41: #{regression_forward.1} parent=1 // pred_fallthru
      _
    %v74 = vld [vmem:[%s0] sm:$0xff]
    %v75 = vld [vmem:[#allocation2] sm:$0xff]
    %v76 = vld [vmem:[#allocation2 + $0x8] sm:$0xff]
    %v77 = vld [vmem:[#allocation2 + $0x10] sm:$0xff]
    %v78 = vld [vmem:[#allocation2 + $0x18] sm:$0xff]
    %v79 = vld [vmem:[#allocation2 + $0x20] sm:$0xff]
    %v80 = vld [vmem:[#allocation2 + $0x28] sm:$0xff]
    %v81 = vld [vmem:[#allocation2 + $0x30] sm:$0xff]
    %v82 = vld [vmem:[#allocation2 + $0x38] sm:$0xff]
    %v83 = vld [vmem:[#allocation2 + $0x40] sm:$0xff]
    %v84 = vld [vmem:[#allocation2 + $0x48] sm:$0xff]
    %v85 = vld [vmem:[#allocation2 + $0x50] sm:$0xff]
    %v86 = vld [vmem:[#allocation2 + $0x58] sm:$0xff]
    %v87 = vld [vmem:[#allocation2 + $0x60] sm:$0xff]
    %v88 = vld [vmem:[#allocation2 + $0x68] sm:$0xff]
    %v89 = vld [vmem:[#allocation2 + $0x70] sm:$0xff]
    %v90 = vld [vmem:[#allocation2 + $0x78] sm:$0xff]
    %v91 = vld [vmem:[%s2] sm:$0x1]
    %v93 = vperm.slane %v91, 0
    %95 = vmatpush.msra.mxu0 %v90
    %96 = vmatpush.msra.mxu0 %v89
    %97 = vmatpush.msra.mxu0 %v88
    %98 = vmatpush.msra.mxu0 %v87
    %99 = vmatpush.msra.mxu0 %v86
    %100 = vmatpush.msra.mxu0 %v85
    %101 = vmatpush.msra.mxu0 %v84
    %102 = vmatpush.msra.mxu0 %v83
    %103 = vmatpush.msra.mxu0 %v82
    %104 = vmatpush.msra.mxu0 %v81
    %105 = vmatpush.msra.mxu0 %v80
    %106 = vmatpush.msra.mxu0 %v79
    %107 = vmatpush.msra.mxu0 %v78
    %108 = vmatpush.msra.mxu0 %v77
    %109 = vmatpush.msra.mxu0 %v76
    %110 = vmatpush.msra.mxu0 %v75
    %111 = vmatmul.f32.gmra.mxu0 %v74
    %v112 = vpop.f32.mrf.mxu0
    %v113 = vadd.f32 %v93, %v112
    %114 = vdwg.mxu0
    %v115 = vld [vmem:[#allocation5] sm:$0xff]
    %v116 = vld [vmem:[#allocation5 + $0x8] sm:$0xff]
    %v117 = vld [vmem:[#allocation5 + $0x10] sm:$0xff]
    %v118 = vld [vmem:[#allocation5 + $0x18] sm:$0xff]
    %v119 = vld [vmem:[#allocation5 + $0x20] sm:$0xff]
    %v120 = vld [vmem:[#allocation5 + $0x28] sm:$0xff]
    %v121 = vld [vmem:[#allocation5 + $0x30] sm:$0xff]
    %v122 = vld [vmem:[#allocation5 + $0x38] sm:$0xff]
    %v123 = vld [vmem:[#allocation5 + $0x40] sm:$0xff]
    %v124 = vld [vmem:[#allocation5 + $0x48] sm:$0xff]
    %v125 = vld [vmem:[#allocation5 + $0x50] sm:$0xff]
    %v126 = vld [vmem:[#allocation5 + $0x58] sm:$0xff]
    %v127 = vld [vmem:[#allocation5 + $0x60] sm:$0xff]
    %v128 = vld [vmem:[#allocation5 + $0x68] sm:$0xff]
    %v129 = vld [vmem:[#allocation5 + $0x70] sm:$0xff]
    %v130 = vld [vmem:[#allocation5 + $0x78] sm:$0xff]
    %v131 = vld [vmem:[%s4] sm:$0x1]
    %v133 = vperm.slane %v131, 0
    %135 = vmatpush.msra.mxu0 %v130
    %136 = vmatpush.msra.mxu0 %v129
    %137 = vmatpush.msra.mxu0 %v128
    %138 = vmatpush.msra.mxu0 %v127
    %139 = vmatpush.msra.mxu0 %v126
    %140 = vmatpush.msra.mxu0 %v125
    %141 = vmatpush.msra.mxu0 %v124
    %142 = vmatpush.msra.mxu0 %v123
    %143 = vmatpush.msra.mxu0 %v122
    %144 = vmatpush.msra.mxu0 %v121
    %145 = vmatpush.msra.mxu0 %v120
    %146 = vmatpush.msra.mxu0 %v119
    %147 = vmatpush.msra.mxu0 %v118
    %148 = vmatpush.msra.mxu0 %v117
    %149 = vmatpush.msra.mxu0 %v116
    %150 = vmatpush.msra.mxu0 %v115
    %151 = vmatmul.f32.gmra.mxu0 %v113
    %v152 = vpop.f32.mrf.mxu0
    %v153 = vadd.f32 %v133, %v152
    %154 = vdwg.mxu0
    %v155 = vld [vmem:[#allocation7] sm:$0xff]
    %v156 = vld [vmem:[#allocation7 + $0x8] sm:$0xff]
    %v157 = vld [vmem:[#allocation7 + $0x10] sm:$0xff]
    %v158 = vld [vmem:[#allocation7 + $0x18] sm:$0xff]
    %v159 = vld [vmem:[#allocation7 + $0x20] sm:$0xff]
    %v160 = vld [vmem:[#allocation7 + $0x28] sm:$0xff]
    %v161 = vld [vmem:[#allocation7 + $0x30] sm:$0xff]
    %v162 = vld [vmem:[#allocation7 + $0x38] sm:$0xff]
    %v163 = vld [vmem:[#allocation7 + $0x40] sm:$0xff]
    %v164 = vld [vmem:[#allocation7 + $0x48] sm:$0xff]
    %v165 = vld [vmem:[#allocation7 + $0x50] sm:$0xff]
    %v166 = vld [vmem:[#allocation7 + $0x58] sm:$0xff]
    %v167 = vld [vmem:[#allocation7 + $0x60] sm:$0xff]
    %v168 = vld [vmem:[#allocation7 + $0x68] sm:$0xff]
    %v169 = vld [vmem:[#allocation7 + $0x70] sm:$0xff]
    %v170 = vld [vmem:[#allocation7 + $0x78] sm:$0xff]
    %v171 = vld [vmem:[%s6] sm:$0x1]
    %v173 = vperm.slane %v171, 0
    %175 = vmatpush.msra.mxu0 %v170
    %176 = vmatpush.msra.mxu0 %v169
    %177 = vmatpush.msra.mxu0 %v168
    %178 = vmatpush.msra.mxu0 %v167
    %179 = vmatpush.msra.mxu0 %v166
    %180 = vmatpush.msra.mxu0 %v165
    %181 = vmatpush.msra.mxu0 %v164
    %182 = vmatpush.msra.mxu0 %v163
    %183 = vmatpush.msra.mxu0 %v162
    %184 = vmatpush.msra.mxu0 %v161
    %185 = vmatpush.msra.mxu0 %v160
    %186 = vmatpush.msra.mxu0 %v159
    %187 = vmatpush.msra.mxu0 %v158
    %188 = vmatpush.msra.mxu0 %v157
    %189 = vmatpush.msra.mxu0 %v156
    %190 = vmatpush.msra.mxu0 %v155
    %191 = vmatmul.f32.gmra.mxu0 %v153
    %v192 = vpop.f32.mrf.mxu0
    %v193 = vadd.f32 %v173, %v192
    %194 = vdwg.mxu0
    %195 = vst [vmem:[#allocation8] sm:$0xff] %v193
    // Predicated region
    $region42: #{regression_forward.1} parent=1 // pred_check
      _
    $region43: #{regression_forward.1} parent=1 // pred_check_branch
      %197 = sbr.rel (0) target = $region45
    $region44: #{regression_forward.1} parent=1 // pred_region
      %199 = vsyncadd [#allocation4], 0
      %s201 = sshll.u32 [#allocation8], 4
      %s202 = int_to_ptr.vmem [resolvable:$true] %s201
      %s203 = sshll.u32 %s7, 4
      %s204 = int_to_ptr.hbm [resolvable:$true] %s203
      %206 = dma.vmem_to_hbm [thread:$0]  %s202, 128, %s204, [#allocation4]
    $region45: #{regression_forward.1} parent=1 // pred_fallthru
      _
    // Predicated region
    $region46: #{regression_forward.1} parent=1 // pred_check
      _
    $region47: #{regression_forward.1} parent=1 // pred_check_branch
      %208 = sbr.rel (0) target = $region49
    $region48: #{regression_forward.1} parent=1 // pred_region
      %210 = dma.done [#allocation4], 128
    $region49: #{regression_forward.1} parent=1 // pred_fallthru
      _
    %211 = vsyncpa [#allocation3], 1
    %212 = vsyncpa [#allocation6], 1
    %213 = vsyncpa [#allocation4], 1

</llo_original>
